<compile_context>
chip_gen: v5e
topology: v5e:2x2
jax: 0.10.0
libtpu: 0.0.40
codegen_flags: <defaults>
</compile_context>

<pallas_src>
import functools
import jax
import jax.numpy as jnp
from jax.experimental import pallas as pl
from jax.experimental.pallas import tpu as pltpu


_VMEM_LIMIT = 48 * 1024 * 1024      # explicit scoped-VMEM cap (safe for v7x's 64 MiB VMEM)
_MAX_WBLOCK = 4 * 1024 * 1024       # bf16 weight-block byte cap per grid step


def _rup(x, m):
    return (x + m - 1) // m * m


# ----------------------------------------------------------------------------
# GEMM kernels: out = act(A @ Wpacked + bias [+ residual])
# ----------------------------------------------------------------------------

def _matmul_kernel(a_ref, b_ref, bias_ref, o_ref, acc_ref, *, relu):
    @pl.when(pl.program_id(2) == 0)
    def _():
        acc_ref[...] = jnp.zeros_like(acc_ref)

    acc_ref[...] += jnp.dot(a_ref[...], b_ref[...],
                            preferred_element_type=jnp.float32)

    @pl.when(pl.program_id(2) == pl.num_programs(2) - 1)
    def _():
        y = acc_ref[...] + bias_ref[...]
        if relu:
            y = jnp.maximum(y, 0.0)
        o_ref[...] = y.astype(o_ref.dtype)


def _matmul_res_kernel(a_ref, b_ref, bias_ref, r_ref, o_ref, acc_ref, *, relu):
    @pl.when(pl.program_id(2) == 0)
    def _():
        acc_ref[...] = jnp.zeros_like(acc_ref)

    acc_ref[...] += jnp.dot(a_ref[...], b_ref[...],
                            preferred_element_type=jnp.float32)

    @pl.when(pl.program_id(2) == pl.num_programs(2) - 1)
    def _():
        y = acc_ref[...] + bias_ref[...] + r_ref[...].astype(jnp.float32)
        if relu:
            y = jnp.maximum(y, 0.0)
        o_ref[...] = y.astype(o_ref.dtype)


def _pick_tiles(Mp, Kp, Np):
    """Large weight tiles (workload is HBM-weight-streaming bound).

    tn: full width for narrow layers, Np/2 (capped at 2048) for wide ones so the
        j grid axis keeps >= 2 "parallel" blocks (v7x megacore sharding).
    tk: largest divisor of Kp (incl. Kp itself) keeping the bf16 weight block <= ~4 MB.
    """
    tm = min(128, Mp)
    tn = min(Np // 2, 2048) if Np >= 1024 else Np
    max_tk = _MAX_WBLOCK // (2 * tn)
    tk = 128
    for cand in (Kp, 2048, 1024, 512, 256, 128):
        if cand <= max_tk and Kp % cand == 0:
            tk = cand
            break
    return tm, tk, tn


def matmul_bias_act(a, wp, bias, relu, residual=None, out_dtype=jnp.bfloat16):
    """(M,K) bf16 @ pre-packed (Kp,Np) bf16 weights, fused bias(+residual)(+ReLU) epilogue.

    Returns the full padded (Mp, Np) result; padded rows/cols stay consistent (zero weight
    rows/cols) so downstream layers can consume them directly without extra pads/slices.
    """
    a = a.astype(jnp.bfloat16)
    M, K = a.shape
    Kp, Np = wp.shape
    assert Kp % 128 == 0 and Np % 128 == 0 and K <= Kp

    Mp = _rup(M, 8) if M < 128 else _rup(M, 128)
    tm, tk, tn = _pick_tiles(Mp, Kp, Np)
    grid = (Mp // tm, Np // tn, Kp // tk)

    a_p = a if (Mp == M and Kp == K) else jnp.pad(a, ((0, Mp - M), (0, Kp - K)))

    in_specs = [
        pl.BlockSpec((tm, tk), lambda i, j, k: (i, k)),
        pl.BlockSpec((tk, tn), lambda i, j, k: (k, j)),
        pl.BlockSpec((1, tn), lambda i, j, k: (0, j)),
    ]
    operands = [a_p, wp, bias]
    if residual is not None:
        assert residual.shape[0] == M and residual.shape[1] == Np
        r_p = residual if Mp == M else jnp.pad(residual, ((0, Mp - M), (0, 0)))
        in_specs.append(pl.BlockSpec((tm, tn), lambda i, j, k: (i, j)))
        operands.append(r_p.astype(jnp.bfloat16))
        kern = functools.partial(_matmul_res_kernel, relu=relu)
    else:
        kern = functools.partial(_matmul_kernel, relu=relu)

    return pl.pallas_call(
        kern,
        out_shape=jax.ShapeDtypeStruct((Mp, Np), out_dtype),
        grid_spec=pltpu.PrefetchScalarGridSpec(
            num_scalar_prefetch=0,
            grid=grid,
            in_specs=in_specs,
            out_specs=pl.BlockSpec((tm, tn), lambda i, j, k: (i, j)),
            scratch_shapes=[pltpu.VMEM((tm, tn), jnp.float32)],
        ),
        compiler_params=pltpu.CompilerParams(
            dimension_semantics=("parallel", "parallel", "arbitrary"),
            vmem_limit_bytes=_VMEM_LIMIT),
    )(*operands)


# ----------------------------------------------------------------------------
# Direct 3x3 stride-1 conv kernel: whole image per grid step, in-kernel im2col
# ----------------------------------------------------------------------------

def _conv3x3_kernel(x_ref, w_ref, b_ref, o_ref, *, cin, relu):
    # x_ref: (1, H+2, W+2, Cp) padded image;  w_ref: (9*Cp, Np);  o_ref: (1, H, W, Np)
    H, W = o_ref.shape[1], o_ref.shape[2]
    tn = w_ref.shape[1]
    bias = b_ref[...]
    for h in range(H):                                # unrolled: H <= 8
        acc = jnp.zeros((W, tn), jnp.float32)
        for i in range(3):
            row = x_ref[0, h + i]                     # (W+2, Cp)
            for j in range(3):
                win = row[j:j + W, :]                 # (W, Cp)
                wsl = w_ref[(i * 3 + j) * cin:(i * 3 + j + 1) * cin, :]
                acc += jnp.dot(win, wsl, preferred_element_type=jnp.float32)
        y = acc + bias
        if relu:
            y = jnp.maximum(y, 0.0)
        o_ref[0, h] = y.astype(o_ref.dtype)


def conv3x3_s1p1(x, p, relu=True):
    """Conv2d(k=3, s=1, p=1, bias=False) + folded BN (+ReLU), NHWC bf16, 128-lane-padded C."""
    N, H, W, Cp = x.shape
    assert p['kh'] == 3 and p['kw'] == 3 and p['cin'] == Cp
    xp = jnp.pad(x, ((0, 0), (1, 1), (1, 1), (0, 0)))
    Kp, Np = p['wp'].shape
    return pl.pallas_call(
        functools.partial(_conv3x3_kernel, cin=Cp, relu=relu),
        out_shape=jax.ShapeDtypeStruct((N, H, W, Np), jnp.bfloat16),
        grid_spec=pltpu.PrefetchScalarGridSpec(
            num_scalar_prefetch=0,
            grid=(N,),
            in_specs=[
                pl.BlockSpec((1, H + 2, W + 2, Cp), lambda n: (n, 0, 0, 0)),
                pl.BlockSpec((Kp, Np), lambda n: (0, 0)),
                pl.BlockSpec((1, Np), lambda n: (0, 0)),
            ],
            out_specs=pl.BlockSpec((1, H, W, Np), lambda n: (n, 0, 0, 0)),
        ),
        compiler_params=pltpu.CompilerParams(
            dimension_semantics=("parallel",),
            vmem_limit_bytes=_VMEM_LIMIT),
    )(xp, p['wp'], p['b'])


# ----------------------------------------------------------------------------
# MaxPool2d(3, stride=2, padding=1): whole image per grid step
# ----------------------------------------------------------------------------

def _maxpool_kernel(xe_ref, xo_ref, o_ref):
    oh, ow = o_ref.shape[1], o_ref.shape[2]
    for h in range(oh):                               # unrolled: oh <= 8
        m = None
        for i in range(3):
            re = xe_ref[0, 2 * h + i]                 # even padded cols  (We, C)
            ro = xo_ref[0, 2 * h + i]                 # odd  padded cols  (Wo, C)
            cand = jnp.maximum(jnp.maximum(re[:ow, :], ro[:ow, :]), re[1:ow + 1, :])
            m = cand if m is None else jnp.maximum(m, cand)
        o_ref[0, h] = m.astype(o_ref.dtype)


def maxpool_3x3_s2_p1(x):
    N, H, W, C = x.shape
    oh = (H - 1) // 2 + 1
    ow = (W - 1) // 2 + 1
    xpad = jnp.pad(x, ((0, 0), (1, 1), (1, 1), (0, 0)), constant_values=-jnp.inf)
    xe = xpad[:, :, 0::2, :]   # padded cols 0,2,4,...
    xo = xpad[:, :, 1::2, :]   # padded cols 1,3,5,...
    return pl.pallas_call(
        _maxpool_kernel,
        out_shape=jax.ShapeDtypeStruct((N, oh, ow, C), x.dtype),
        grid_spec=pltpu.PrefetchScalarGridSpec(
            num_scalar_prefetch=0,
            grid=(N,),
            in_specs=[
                pl.BlockSpec((1,) + xe.shape[1:], lambda n: (n, 0, 0, 0)),
                pl.BlockSpec((1,) + xo.shape[1:], lambda n: (n, 0, 0, 0)),
            ],
            out_specs=pl.BlockSpec((1, oh, ow, C), lambda n: (n, 0, 0, 0)),
        ),
        compiler_params=pltpu.CompilerParams(dimension_semantics=("parallel",)),
    )(xe, xo)


# ----------------------------------------------------------------------------
# Global average pool (only used when the final spatial size is > 1x1)
# ----------------------------------------------------------------------------

def _avgpool_kernel(x_ref, o_ref, *, inv):
    x = x_ref[...].astype(jnp.float32)                # (1, H, W, C)
    o_ref[0] = (jnp.sum(x, axis=(1, 2)) * inv).astype(o_ref.dtype)


def global_avgpool(x):
    N, H, W, C = x.shape
    out = pl.pallas_call(
        functools.partial(_avgpool_kernel, inv=1.0 / (H * W)),
        out_shape=jax.ShapeDtypeStruct((N, 1, C), jnp.bfloat16),
        grid_spec=pltpu.PrefetchScalarGridSpec(
            num_scalar_prefetch=0,
            grid=(N,),
            in_specs=[pl.BlockSpec((1, H, W, C), lambda n: (n, 0, 0, 0))],
            out_specs=pl.BlockSpec((1, 1, C), lambda n: (n, 0, 0)),
        ),
        compiler_params=pltpu.CompilerParams(dimension_semantics=("parallel",)),
    )(x)
    return out.reshape(N, C)


# ----------------------------------------------------------------------------
# Conv glue (im2col fallback only for the 7x7 stem and the 3 stride-2 3x3 convs)
# ----------------------------------------------------------------------------

def _im2col(x, kh, kw, stride, pad):
    N, H, W, C = x.shape
    xp = jnp.pad(x, ((0, 0), (pad, pad), (pad, pad), (0, 0)))
    Hp, Wp = H + 2 * pad, W + 2 * pad
    oh = (Hp - kh) // stride + 1
    ow = (Wp - kw) // stride + 1
    cols = []
    for i in range(kh):
        for j in range(kw):
            sl = jax.lax.slice(
                xp, (0, i, j, 0),
                (N, i + stride * (oh - 1) + 1, j + stride * (ow - 1) + 1, C),
                (1, stride, stride, 1))
            cols.append(sl)
    patches = jnp.concatenate(cols, axis=-1)          # (kh, kw, cin) column order
    return patches.reshape(N * oh * ow, kh * kw * C), oh, ow


def conv_im2col(x, p, stride, pad, relu):
    # TODO(synk): replace with an in-kernel strided direct conv (even/odd column split).
    N = x.shape[0]
    cols, oh, ow = _im2col(x, p['kh'], p['kw'], stride, pad)
    M = cols.shape[0]
    y = matmul_bias_act(cols, p['wp'], p['b'], relu)
    return y[:M].reshape(N, oh, ow, p['np'])


def conv1x1(x, p, stride, relu, residual=None):
    """1x1 conv + folded BN; optional fused residual-add + ReLU in the GEMM epilogue."""
    if stride > 1:
        x = x[:, ::stride, ::stride, :]
    N, H, W, C = x.shape
    M = N * H * W
    a = x.reshape(M, C)
    r = None if residual is None else residual.reshape(M, -1)
    y = matmul_bias_act(a, p['wp'], p['b'], relu, residual=r)
    return y[:M].reshape(N, H, W, p['np'])


# ----------------------------------------------------------------------------
# Deterministic parameter construction + one-time packing (BN scale folded)
# ----------------------------------------------------------------------------

def _he_conv(key, cout, cin, kh, kw):
    fan_in = cin * kh * kw
    std = (2.0 / fan_in) ** 0.5
    return jax.random.normal(key, (cout, cin, kh, kw), jnp.float32) * std


def _linear(key, cout, cin):
    std = (1.0 / cin) ** 0.5
    return jax.random.normal(key, (cout, cin), jnp.float32) * std


def _bn_fold(key, c):
    # eval-mode BN folded to per-channel (scale, bias)
    k1, k2 = jax.random.split(key)
    scale = 1.0 + 0.1 * jax.random.normal(k1, (c,), jnp.float32)
    bias = 0.05 * jax.random.normal(k2, (c,), jnp.float32)
    return scale, bias


def _pack(wmat, bias, cout):
    K = wmat.shape[0]
    Kp, Np = _rup(K, 128), _rup(cout, 128)
    wp = jnp.pad(wmat, ((0, Kp - K), (0, Np - cout))).astype(jnp.bfloat16)
    b = jnp.pad(bias, (0, Np - cout)).reshape(1, Np).astype(jnp.float32)
    return wp, b


def pack_conv(w, bn, cin_pad=None):
    """Fold eval-mode BN and pack to (Kp, Np) bf16 in (kh, kw, cin) row order.

    cin_pad pads each per-tap cin block so the kernel can consume channel-padded
    (128-lane) activations directly without slicing.
    """
    cout, cin, kh, kw = w.shape
    scale, bias = bn
    cp = cin if cin_pad is None else cin_pad
    wmat = jnp.transpose(w, (2, 3, 1, 0)) * scale[None, None, None, :]   # (kh,kw,cin,cout)
    if cp != cin:
        wmat = jnp.pad(wmat, ((0, 0), (0, 0), (0, cp - cin), (0, 0)))
    wmat = wmat.reshape(kh * kw * cp, cout)
    wp, b = _pack(wmat, bias, cout)
    return {'wp': wp, 'b': b, 'kh': kh, 'kw': kw, 'cin': cp, 'cout': cout,
            'np': wp.shape[1]}


def pack_linear(w, scale, bias):
    cout, _ = w.shape
    wmat = w.T * scale[None, :]
    wp, b = _pack(wmat, bias, cout)
    return {'wp': wp, 'b': b, 'cout': cout, 'np': wp.shape[1]}


def init_params(key, num_rotations):
    kb, kc = jax.random.split(key)
    keys = jax.random.split(kb, 4)
    backbone = {
        'conv1': pack_conv(_he_conv(keys[0], 64, 3, 7, 7), _bn_fold(keys[1], 64)),
    }
    stage_cfg = [(64, 3, 1), (128, 4, 2), (256, 6, 2), (512, 3, 2)]
    cin = 64
    layers = []
    lkey = keys[2]
    for width, blocks, stride in stage_cfg:
        stage = []
        for b in range(blocks):
            lkey, bkey = jax.random.split(lkey)
            ks = jax.random.split(bkey, 8)
            blk = {
                'stride': stride if b == 0 else 1,
                'c1': pack_conv(_he_conv(ks[0], width, cin, 1, 1), _bn_fold(ks[1], width)),
                # per-tap cin padded to 128 so channel-padded activations feed it directly
                'c2': pack_conv(_he_conv(ks[2], width, width, 3, 3), _bn_fold(ks[3], width),
                                cin_pad=_rup(width, 128)),
                'c3': pack_conv(_he_conv(ks[4], width * 4, width, 1, 1),
                                _bn_fold(ks[5], width * 4)),
            }
            if b == 0:
                blk['cd'] = pack_conv(_he_conv(ks[6], width * 4, cin, 1, 1),
                                      _bn_fold(ks[7], width * 4))
            stage.append(blk)
            cin = width * 4
        layers.append(stage)
    backbone['layers'] = layers
    kfw, kfb = jax.random.split(keys[3])
    backbone['fc'] = pack_linear(_linear(kfw, 1000, 2048),
                                 jnp.ones((1000,), jnp.float32),
                                 0.01 * jax.random.normal(kfb, (1000,), jnp.float32))
    ks = jax.random.split(kc, 8)
    # TODO(synk): optional int8 (v5e/v6e) or fp8 (v7x) packing of the wide head weights would
    #             halve the HBM streaming floor; kept bf16 here for simplicity/accuracy.
    classifier = {
        'l1': pack_linear(_linear(ks[0], 4096, 1000), *_bn_fold(ks[1], 4096)),
        'l2': pack_linear(_linear(ks[2], 4096, 4096), *_bn_fold(ks[3], 4096)),
        'l3': pack_linear(_linear(ks[4], 1000, 4096), *_bn_fold(ks[5], 1000)),
        'l4': pack_linear(_linear(ks[6], num_rotations, 1000),
                          jnp.ones((num_rotations,), jnp.float32),
                          0.01 * jax.random.normal(ks[7], (num_rotations,), jnp.float32)),
    }
    return {'backbone': backbone, 'classifier': classifier}


# ----------------------------------------------------------------------------
# Forward pass
# ----------------------------------------------------------------------------

def bottleneck(p, x):
    out = conv1x1(x, p['c1'], stride=1, relu=True)
    if p['stride'] == 1:
        out = conv3x3_s1p1(out, p['c2'], relu=True)
    else:
        out = conv_im2col(out, p['c2'], stride=p['stride'], pad=1, relu=True)
    identity = (conv1x1(x, p['cd'], stride=p['stride'], relu=False)
                if 'cd' in p else x)
    # conv3 (1x1) with the residual add + ReLU fused into the GEMM epilogue
    return conv1x1(out, p['c3'], stride=1, relu=True, residual=identity)


def resnet50_forward(p, x):
    x = conv_im2col(x, p['conv1'], stride=2, pad=3, relu=True)   # (N,16,16,128) padded C
    x = maxpool_3x3_s2_p1(x)                                     # (N, 8, 8,128) padded C
    for stage in p['layers']:
        for blk in stage:
            x = bottleneck(blk, x)
    N, H, W, C = x.shape
    if H == 1 and W == 1:
        feats = x.reshape(N, C)          # AdaptiveAvgPool2d((1,1)) over 1x1 == reshape
    else:
        feats = global_avgpool(x)
    # fc; returns padded (8, 1024) which the classifier head consumes directly
    return matmul_bias_act(feats, p['fc']['wp'], p['fc']['b'], relu=False)


def classifier_forward(p, x):
    # Linear(bias=False) -> BN1d -> ReLU, x3, then Linear(1000, num_rotations) with bias.
    # Activations stay row/col padded throughout; the caller slices the final logits.
    x = matmul_bias_act(x, p['l1']['wp'], p['l1']['b'], relu=True)
    x = matmul_bias_act(x, p['l2']['wp'], p['l2']['b'], relu=True)
    x = matmul_bias_act(x, p['l3']['wp'], p['l3']['b'], relu=True)
    x = matmul_bias_act(x, p['l4']['wp'], p['l4']['b'], relu=False,
                        out_dtype=jnp.float32)
    return x


def rotnet_resnet50_forward(params, x_nchw):
    N = x_nchw.shape[0]
    x = jnp.transpose(x_nchw, (0, 2, 3, 1)).astype(jnp.bfloat16)   # NCHW -> NHWC bf16
    feats = resnet50_forward(params['backbone'], x)
    logits = classifier_forward(params['classifier'], feats)
    nrot = params['classifier']['l4']['cout']
    return logits[:N, :nrot]


# ----------------------------------------------------------------------------

if __name__ == "__main__":
    cfg = {'backbone_type': 'scratch', 'drop_out': 0.0,
           'batch_norm': True, 'num_rotations': 4}
    key = jax.random.PRNGKey(0)
    kx, kp = jax.random.split(key)
    params = init_params(kp, cfg['num_rotations'])
    x = jax.random.normal(kx, (2, 3, 32, 32), jnp.float32)   # small NCHW input
    out = rotnet_resnet50_forward(params, x)
    out = jax.block_until_ready(out)
    assert out.shape == (2, cfg['num_rotations']), out.shape
    assert bool(jnp.all(jnp.isfinite(out)))
    print("KERNEL_OK")
</pallas_src>

<mosaic_0001>
module attributes {stable_mosaic.version = 11 : i64} {
  func.func @_matmul_kernel(%arg0: i32, %arg1: i32, %arg2: i32, %arg3: memref<128x256xbf16, #tpu.memory_space<vmem>>, %arg4: memref<256x128xbf16, #tpu.memory_space<vmem>>, %arg5: memref<1x128xf32, #tpu.memory_space<vmem>>, %arg6: memref<128x128xbf16, #tpu.memory_space<vmem>>, %arg7: memref<128x128xf32, #tpu.memory_space<vmem>>) attributes {dimension_semantics = [#tpu.dimension_semantics<parallel>, #tpu.dimension_semantics<parallel>, #tpu.dimension_semantics<arbitrary>], iteration_bounds = array<i64: 4, 1, 1>, scalar_prefetch = 0 : i64, scratch_operands = 1 : i64, tpu.core_type = #tpu.core_type<tc>, window_params = [{transform_indices = @transform_0, window_bounds = array<i64: 128, 256>}, {transform_indices = @transform_1, window_bounds = array<i64: 256, 128>}, {transform_indices = @transform_2, window_bounds = array<i64: 1, 128>}, {transform_indices = @transform_3, window_bounds = array<i64: 128, 128>}]} {
    %c0_i32 = arith.constant 0 : i32
    %0 = arith.cmpi eq, %arg2, %c0_i32 : i32
    %1 = arith.extui %0 : i1 to i32
    %c0_i32_0 = arith.constant 0 : i32
    %2 = arith.cmpi ne, %1, %c0_i32_0 : i32
    scf.if %2 {
      %cst_10 = arith.constant 0.000000e+00 : f32
      %12 = vector.broadcast %cst_10 : f32 to vector<128x128xf32>
      %c0_11 = arith.constant 0 : index
      %c0_12 = arith.constant 0 : index
      %13 = vector.load %arg7[%c0_11, %c0_12] : memref<128x128xf32, #tpu.memory_space<vmem>>, vector<128x128xf32>
      tpu.vector_store %arg7[%c0_11, %c0_12], %12 {strides = array<i32>} : memref<128x128xf32, #tpu.memory_space<vmem>>, vector<128x128xf32>,
    } else {
    }
    %c0 = arith.constant 0 : index
    %c0_1 = arith.constant 0 : index
    %3 = vector.load %arg7[%c0, %c0_1] : memref<128x128xf32, #tpu.memory_space<vmem>>, vector<128x128xf32>
    %c0_2 = arith.constant 0 : index
    %c0_3 = arith.constant 0 : index
    %4 = vector.load %arg3[%c0_2, %c0_3] : memref<128x256xbf16, #tpu.memory_space<vmem>>, vector<128x256xbf16>
    %c0_4 = arith.constant 0 : index
    %c0_5 = arith.constant 0 : index
    %5 = vector.load %arg4[%c0_4, %c0_5] : memref<256x128xbf16, #tpu.memory_space<vmem>>, vector<256x128xbf16>
    %cst = arith.constant dense<0.000000e+00> : vector<128x128xf32>
    %6 = tpu.matmul %4, %5, %cst {dimension_numbers = #tpu.dot_dimension_numbers<[1], [0], [0], [1], [0, 0, 1, 1], [], []>} : vector<128x256xbf16>, vector<256x128xbf16>, vector<128x128xf32> -> vector<128x128xf32>
    %7 = arith.addf %3, %6 : vector<128x128xf32>
    %c0_6 = arith.constant 0 : index
    %c0_7 = arith.constant 0 : index
    %8 = vector.load %arg7[%c0_6, %c0_7] : memref<128x128xf32, #tpu.memory_space<vmem>>, vector<128x128xf32>
    tpu.vector_store %arg7[%c0_6, %c0_7], %7 {strides = array<i32>} : memref<128x128xf32, #tpu.memory_space<vmem>>, vector<128x128xf32>,
    %c0_i32_8 = arith.constant 0 : i32
    %9 = arith.cmpi eq, %arg2, %c0_i32_8 : i32
    %10 = arith.extui %9 : i1 to i32
    %c0_i32_9 = arith.constant 0 : i32
    %11 = arith.cmpi ne, %10, %c0_i32_9 : i32
    scf.if %11 {
      %c0_10 = arith.constant 0 : index
      %c0_11 = arith.constant 0 : index
      %12 = vector.load %arg7[%c0_10, %c0_11] : memref<128x128xf32, #tpu.memory_space<vmem>>, vector<128x128xf32>
      %c0_12 = arith.constant 0 : index
      %c0_13 = arith.constant 0 : index
      %13 = vector.load %arg5[%c0_12, %c0_13] : memref<1x128xf32, #tpu.memory_space<vmem>>, vector<1x128xf32>
      %14 = vector.broadcast %13 : vector<1x128xf32> to vector<128x128xf32>
      %15 = arith.addf %12, %14 : vector<128x128xf32>
      %cst_14 = arith.constant 0.000000e+00 : f32
      %16 = vector.broadcast %cst_14 : f32 to vector<128x128xf32>
      %17 = arith.maximumf %15, %16 : vector<128x128xf32>
      %18 = arith.truncf %17 : vector<128x128xf32> to vector<128x128xbf16>
      %c0_15 = arith.constant 0 : index
      %c0_16 = arith.constant 0 : index
      %19 = vector.load %arg6[%c0_15, %c0_16] : memref<128x128xbf16, #tpu.memory_space<vmem>>, vector<128x128xbf16>
      tpu.vector_store %arg6[%c0_15, %c0_16], %18 {strides = array<i32>} : memref<128x128xbf16, #tpu.memory_space<vmem>>, vector<128x128xbf16>,
    } else {
    }
    return
  }
  func.func @transform_0(%arg0: i32, %arg1: i32, %arg2: i32) -> (i32, i32) {
    %c0_i32 = arith.constant 0 : i32
    return %arg0, %arg2 : i32, i32
  }
  func.func @transform_1(%arg0: i32, %arg1: i32, %arg2: i32) -> (i32, i32) {
    %c0_i32 = arith.constant 0 : i32
    return %arg2, %arg1 : i32, i32
  }
  func.func @transform_2(%arg0: i32, %arg1: i32, %arg2: i32) -> (i32, i32) {
    %c0_i32 = arith.constant 0 : i32
    %c0_i32_0 = arith.constant 0 : i32
    return %c0_i32, %arg1 : i32, i32
  }
  func.func @transform_3(%arg0: i32, %arg1: i32, %arg2: i32) -> (i32, i32) {
    %c0_i32 = arith.constant 0 : i32
    return %arg0, %arg1 : i32, i32
  }
}

</mosaic_0001>

<llo_original>
// kernel: tpu_custom_call.1
$region0: #{tpu_custom_call.1}
  #allocation0 [shape = 'u32[]', space=smem, size = 0x4, offset = 0x4, fixed_abs, tag = 'smem constant byte address 0x4 - core index']
  #allocation1 [shape = 'u32[72,128]{1,0:T(1,128)}', space=vmem, size = 0x9000, scoped, tag = 'internal scratch']
  #allocation2 [shape = 'f32[128,128]{1,0:T(8,128)}', space=vmem, size = 0x10000, scoped, tag = 'scratch operand']
  %s0 = inlined_call_operand.hbm [shape: bf16[512,256], index: 0, kind: input, shape index: {}]
  %s1 = inlined_call_operand.hbm [shape: bf16[256,128], index: 1, kind: input, shape index: {}]
  %s2 = inlined_call_operand.vmem [shape: f32[1,128], index: 2, kind: input, shape index: {}]
  %s3 = inlined_call_operand.hbm [shape: bf16[512,128], index: 3, kind: output, shape index: {}]
  %s4 = sld [smem:[#allocation0]]
  $region61: #{tpu_custom_call.1} parent=0
    _
  %s6 = ssub.s32 1, %s4
  %s7 = scalar_select 0, %s6, %s4
  $region1: #{tpu_custom_call.1} parent=0
    #allocation3 [shape = 'u8[131072]{0}', space=vmem, size = 0x20000, scoped, tag = 'input window, operand 0']
    #allocation4 [shape = 's32[2]{0}', space=sflag, size = 0x8, scoped, tag = 'scoped memory for tpu_custom_call.1']
    #allocation5 [shape = 's32[2]{0}', space=sflag, size = 0x8, scoped, tag = 'scoped memory for tpu_custom_call.1']
    #allocation6 [shape = 'u8[65536]{0}', space=vmem, size = 0x10000, scoped, tag = 'input window, operand 1, single buffered']
    #allocation7 [shape = 's32[1]{0}', space=sflag, size = 0x4, scoped, tag = 'scoped memory for tpu_custom_call.1']
    #allocation8 [shape = 'u8[65536]{0}', space=vmem, size = 0x10000, scoped, tag = 'output window, operand 0']
    %8 = vsyncpa [#allocation4], 0
    %s9 = scalar_lea.sflag [#allocation4], 1
    %10 = vsyncpa %s9, 0
    %11 = vsyncpa [#allocation7], 0
    %12 = vsyncpa [#allocation5], 0
    %s13 = scalar_lea.sflag [#allocation5], 1
    %14 = vsyncpa %s13, 0
    loop: start=0, step=1, limit=6
    $region2: #{tpu_custom_call.1} parent=1 // loop_pre_header
      _
    $region3: #{tpu_custom_call.1} parent=1 // loop_header
      %s16 = sphi 0, %s20
      %p17 = scmp.ge.s32.totalorder %s16, 6
      %s23 = sphi 0, %s42
      %s24 = sphi 0, %s38
      %s25 = sphi 0, %s34
      %s26 = sphi 0, %s23
      %s27 = sphi 0, %s24
      %s28 = sphi 0, %s25
      %s29 = sphi 0, %s26
      %s30 = sphi 0, %s27
      %s31 = sphi 0, %s28
      %s47 = sphi 0, %s49
      %s50 = sphi 0, %s47
      %s51 = sphi 0, %s50
      %s67 = sphi 0, %s51
      %s75 = sphi 0, %s77
      %s78 = sphi 0, %s75
      %s79 = sphi 0, %s78
      %s95 = sphi 0, %s79
      %s101 = sphi 0, %s103
      %s104 = sphi 0, %s101
      %s105 = sphi 0, %s104
      %s121 = sphi 0, %s105
      %s129 = sphi 0, %s131
      %s132 = sphi 0, %s129
      %s133 = sphi 0, %s132
      %s149 = sphi 0, %s133
    $region4: #{tpu_custom_call.1} parent=1 // loop_header_branch
      %19 = sbr.rel (%p17) target = $region8
    $region5: #{tpu_custom_call.1} parent=1 // loop_body
      %s21 = ssub.s32 %s16, 1
      %s22 = ssub.s32 %s16, 2
      %s32 = sadd.s32 1, %s25
      %p33 = scmp.ge.s32.totalorder %s32, 1
      %s34 = scalar_select %p33, 0, %s32
      %s35 = sadd.s32 1, %s24
      %s36 = scalar_select %p33, %s35, %s24
      %p37 = scmp.ge.s32.totalorder %s36, 1
      %s38 = scalar_select %p37, 0, %s36
      %s39 = sadd.s32 1, %s23
      %s40 = scalar_select %p37, %s39, %s23
      %p41 = scmp.ge.s32.totalorder %s40, 4
      %s42 = scalar_select %p41, 0, %s40
      %s43 = ssub.s32 %s23, %s42
      %s44 = ssub.s32 %s25, %s34
      %s45 = sor.u32 %s43, %s44
      %p46 = scmp.eq.s32.totalorder %s45, 0
      %s48 = sadd.s32 %s47, 1
      %s49 = scalar_select %p46, %s47, %s48
      %p52 = pneg %p46
      %p53 = scmp.eq.s32.totalorder %s16, 3
      %p54 = por %p52, %p53
      %p55 = scmp.ne.s32.totalorder %s47, %s50
      %p56 = scmp.eq.s32.totalorder %s16, 0
      %p57 = por %p55, %p56
      %p58 = scmp.ne.s32.totalorder %s47, %s50
      %p59 = scmp.eq.s32.totalorder %s21, 3
      %p60 = por %p58, %p59
      %p61 = scmp.ne.s32.totalorder %s50, %s51
      %p62 = scmp.eq.s32.totalorder %s21, 0
      %p63 = por %p61, %p62
      %p64 = scmp.ne.s32.totalorder %s50, %s51
      %p65 = scmp.eq.s32.totalorder %s22, 3
      %p66 = por %p64, %p65
      %p68 = scmp.ne.s32.totalorder %s51, %s67
      %p69 = scmp.eq.s32.totalorder %s22, 0
      %p70 = por %p68, %p69
      %s71 = ssub.s32 %s25, %s34
      %s72 = ssub.s32 %s24, %s38
      %s73 = sor.u32 %s71, %s72
      %p74 = scmp.eq.s32.totalorder %s73, 0
      %s76 = sadd.s32 %s75, 1
      %s77 = scalar_select %p74, %s75, %s76
      %p80 = pneg %p74
      %p81 = scmp.eq.s32.totalorder %s16, 3
      %p82 = por %p80, %p81
      %p83 = scmp.ne.s32.totalorder %s75, %s78
      %p84 = scmp.eq.s32.totalorder %s16, 0
      %p85 = por %p83, %p84
      %p86 = scmp.ne.s32.totalorder %s75, %s78
      %p87 = scmp.eq.s32.totalorder %s21, 3
      %p88 = por %p86, %p87
      %p89 = scmp.ne.s32.totalorder %s78, %s79
      %p90 = scmp.eq.s32.totalorder %s21, 0
      %p91 = por %p89, %p90
      %p92 = scmp.ne.s32.totalorder %s78, %s79
      %p93 = scmp.eq.s32.totalorder %s22, 3
      %p94 = por %p92, %p93
      %p96 = scmp.ne.s32.totalorder %s79, %s95
      %p97 = scmp.eq.s32.totalorder %s22, 0
      %p98 = por %p96, %p97
      %s99 = ssub.s32 %s24, %s38
      %p100 = scmp.eq.s32.totalorder %s99, 0
      %s102 = sadd.s32 %s101, 1
      %s103 = scalar_select %p100, %s101, %s102
      %p106 = pneg %p100
      %p107 = scmp.eq.s32.totalorder %s16, 3
      %p108 = por %p106, %p107
      %p109 = scmp.ne.s32.totalorder %s101, %s104
      %p110 = scmp.eq.s32.totalorder %s16, 0
      %p111 = por %p109, %p110
      %p112 = scmp.ne.s32.totalorder %s101, %s104
      %p113 = scmp.eq.s32.totalorder %s21, 3
      %p114 = por %p112, %p113
      %p115 = scmp.ne.s32.totalorder %s104, %s105
      %p116 = scmp.eq.s32.totalorder %s21, 0
      %p117 = por %p115, %p116
      %p118 = scmp.ne.s32.totalorder %s104, %s105
      %p119 = scmp.eq.s32.totalorder %s22, 3
      %p120 = por %p118, %p119
      %p122 = scmp.ne.s32.totalorder %s105, %s121
      %p123 = scmp.eq.s32.totalorder %s22, 0
      %p124 = por %p122, %p123
      %s125 = ssub.s32 %s23, %s42
      %s126 = ssub.s32 %s24, %s38
      %s127 = sor.u32 %s125, %s126
      %p128 = scmp.eq.s32.totalorder %s127, 0
      %s130 = sadd.s32 %s129, 1
      %s131 = scalar_select %p128, %s129, %s130
      %p134 = pneg %p128
      %p135 = scmp.eq.s32.totalorder %s16, 3
      %p136 = por %p134, %p135
      %p137 = scmp.ne.s32.totalorder %s129, %s132
      %p138 = scmp.eq.s32.totalorder %s16, 0
      %p139 = por %p137, %p138
      %p140 = scmp.ne.s32.totalorder %s129, %s132
      %p141 = scmp.eq.s32.totalorder %s21, 3
      %p142 = por %p140, %p141
      %p143 = scmp.ne.s32.totalorder %s132, %s133
      %p144 = scmp.eq.s32.totalorder %s21, 0
      %p145 = por %p143, %p144
      %p146 = scmp.ne.s32.totalorder %s132, %s133
      %p147 = scmp.eq.s32.totalorder %s22, 3
      %p148 = por %p146, %p147
      %p150 = scmp.ne.s32.totalorder %s133, %s149
      %p151 = scmp.eq.s32.totalorder %s22, 0
      %p152 = por %p150, %p151
      %p153 = scmp.le.s32.totalorder 1, %s16
      %p154 = scmp.lt.s32.totalorder %s16, 5
      %p155 = pnand %p153, %p154
      %p156 = pneg %p155
      // Predicated region
      $region9: #{tpu_custom_call.1} parent=5 // pred_check
        _
      $region10: #{tpu_custom_call.1} parent=5 // pred_check_branch
        %158 = sbr.rel (%p155) target = $region12
      $region11: #{tpu_custom_call.1} parent=5 // pred_region
        %s159 = ssub.s32 %s16, 1
        // Predicated region
        $region13: #{tpu_custom_call.1} parent=11 // pred_check
          %p160 = pneg %p91
        $region14: #{tpu_custom_call.1} parent=11 // pred_check_branch
          %162 = sbr.rel (%p160) target = $region16
        $region15: #{tpu_custom_call.1} parent=11 // pred_region
          %s163 = smul.u32 32, %s28
          %165 = vsyncadd [#allocation7], 0
          %s166 = sadd.s32 %s27, %s163
          %s167 = smul.addr %s166, 4
          %s168 = scalar_lea.hbm %s1, %s167
          %s169 = sshll.u32 %s168, 4
          %s170 = int_to_ptr.hbm [resolvable:$true] %s169
          %s171 = sshll.u32 [#allocation6], 4
          %s172 = int_to_ptr.vmem [resolvable:$true] %s171
          %177 = dma.hbm_to_vmem [thread:$0]  %s170, 2048, %s172, [#allocation7], 64, 64, 4
        $region16: #{tpu_custom_call.1} parent=11 // pred_fallthru
          _
        // Predicated region
        $region17: #{tpu_custom_call.1} parent=11 // pred_check
          %p178 = pneg %p117
        $region18: #{tpu_custom_call.1} parent=11 // pred_check_branch
          %180 = sbr.rel (%p178) target = $region20
        $region19: #{tpu_custom_call.1} parent=11 // pred_region
          %p181 = scmp.lt.s32.totalorder %s27, 0
          %s182 = scalar_select %p181, %s27, 0
          %s183 = scalar_lea.vmem %s2, %s182
        $region20: #{tpu_custom_call.1} parent=11 // pred_fallthru
          _
      $region12: #{tpu_custom_call.1} parent=5 // pred_fallthru
        _
      %p184 = scmp.lt.s32.totalorder %s16, 4
      // Predicated region
      $region21: #{tpu_custom_call.1} parent=5 // pred_check
        %p185 = pneg %p184
      $region22: #{tpu_custom_call.1} parent=5 // pred_check_branch
        %187 = sbr.rel (%p185) target = $region24
      $region23: #{tpu_custom_call.1} parent=5 // pred_region
        // Predicated region
        $region25: #{tpu_custom_call.1} parent=23 // pred_check
          %p188 = pneg %p57
        $region26: #{tpu_custom_call.1} parent=23 // pred_check_branch
          %190 = sbr.rel (%p188) target = $region28
        $region27: #{tpu_custom_call.1} parent=23 // pred_region
          %s191 = sand.u32 %s47, 1
          %s192 = scalar_lea.sflag [#allocation4], %s191
          %s193 = sand.u32 %s47, 1
          %s194 = smul.addr %s193, 128
          %s195 = scalar_lea.vmem [#allocation3], %s194
          %s196 = smul.u32 16, %s23
          %s197 = smul.u32 2, %s25
          %199 = vsyncadd %s192, 0
          %s200 = smul.addr %s196, 2
          %s201 = sadd.s32 %s197, %s200
          %s202 = smul.addr %s201, 4
          %s203 = scalar_lea.hbm %s0, %s202
          %s204 = sshll.u32 %s203, 4
          %s205 = int_to_ptr.hbm [resolvable:$true] %s204
          %s206 = sshll.u32 %s195, 4
          %s207 = int_to_ptr.vmem [resolvable:$true] %s206
          %212 = dma.hbm_to_vmem [thread:$0]  %s205, 2048, %s207, %s192, 128, 128, 8
        $region28: #{tpu_custom_call.1} parent=23 // pred_fallthru
          _
      $region24: #{tpu_custom_call.1} parent=5 // pred_fallthru
        _
      %p213 = scmp.le.s32.totalorder 1, %s16
      %p214 = scmp.lt.s32.totalorder %s16, 5
      %p215 = pnand %p213, %p214
      %p216 = pneg %p215
      // Predicated region
      $region29: #{tpu_custom_call.1} parent=5 // pred_check
        _
      $region30: #{tpu_custom_call.1} parent=5 // pred_check_branch
        %218 = sbr.rel (%p215) target = $region32
      $region31: #{tpu_custom_call.1} parent=5 // pred_region
        %s219 = ssub.s32 %s16, 1
        %s220 = sand.u32 %s50, 1
        %s221 = scalar_lea.sflag [#allocation4], %s220
        %s222 = sand.u32 %s50, 1
        %s223 = smul.addr %s222, 128
        %s224 = scalar_lea.vmem [#allocation3], %s223
        // Predicated region
        $region33: #{tpu_custom_call.1} parent=31 // pred_check
          %p225 = pneg %p63
        $region34: #{tpu_custom_call.1} parent=31 // pred_check_branch
          %227 = sbr.rel (%p225) target = $region36
        $region35: #{tpu_custom_call.1} parent=31 // pred_region
          %229 = dma.done %s221, 2048
        $region36: #{tpu_custom_call.1} parent=31 // pred_fallthru
          _
        // Predicated region
        $region37: #{tpu_custom_call.1} parent=31 // pred_check
          %p230 = pneg %p91
        $region38: #{tpu_custom_call.1} parent=31 // pred_check_branch
          %232 = sbr.rel (%p230) target = $region40
        $region39: #{tpu_custom_call.1} parent=31 // pred_region
          %234 = dma.done [#allocation7], 2048
        $region40: #{tpu_custom_call.1} parent=31 // pred_fallthru
          _
        %s235 = sand.u32 %s50, 1
        %s236 = scalar_lea.sflag [#allocation4], %s235
        %s237 = sand.u32 %s50, 1
        %s238 = smul.addr %s237, 128
        %s239 = scalar_lea.vmem [#allocation3], %s238
        %p240 = pneg %p63
        %p241 = pneg %p60
        %p242 = pneg %p91
        %p243 = pneg %p88
        %p244 = scmp.lt.s32.totalorder %s27, 0
        %s245 = scalar_select %p244, %s27, 0
        %s246 = scalar_lea.vmem %s2, %s245
        %p247 = pneg %p117
        %p248 = pneg %p114
        %p249 = pneg %p145
        %p250 = pneg %p142
        %s251 = sand.u32 %s132, 1
        %s252 = scalar_lea.sflag [#allocation5], %s251
        %s253 = sand.u32 %s132, 1
        %s254 = smul.addr %s253, 64
        %s255 = scalar_lea.vmem [#allocation8], %s254
        %s256 = smul.u32 16, %s26
        %s257 = smul.u32 2, %s28
        %s258 = smul.u32 32, %s28
        %p259 = scmp.lt.s32.totalorder %s27, 0
        %s260 = scalar_select %p259, %s27, 0
        %s261 = scalar_lea.vmem %s2, %s260
        %s262 = smul.u32 16, %s26
        %p263 = scmp.eq.s32.totalorder %s28, 0
        // Predicated region
        $region41: #{tpu_custom_call.1} parent=31 // pred_check
          %p264 = pneg %p263
        $region42: #{tpu_custom_call.1} parent=31 // pred_check_branch
          %266 = sbr.rel (%p264) target = $region44
        $region43: #{tpu_custom_call.1} parent=31 // pred_region
          %267 = vst [vmem:[#allocation2] sm:$0xff] 0.0
          %268 = vst [vmem:[#allocation2 + $0x8] sm:$0xff] 0.0
          %269 = vst [vmem:[#allocation2 + $0x10] sm:$0xff] 0.0
          %270 = vst [vmem:[#allocation2 + $0x18] sm:$0xff] 0.0
          %271 = vst [vmem:[#allocation2 + $0x20] sm:$0xff] 0.0
          %272 = vst [vmem:[#allocation2 + $0x28] sm:$0xff] 0.0
          %273 = vst [vmem:[#allocation2 + $0x30] sm:$0xff] 0.0
          %274 = vst [vmem:[#allocation2 + $0x38] sm:$0xff] 0.0
          %275 = vst [vmem:[#allocation2 + $0x40] sm:$0xff] 0.0
          %276 = vst [vmem:[#allocation2 + $0x48] sm:$0xff] 0.0
          %277 = vst [vmem:[#allocation2 + $0x50] sm:$0xff] 0.0
          %278 = vst [vmem:[#allocation2 + $0x58] sm:$0xff] 0.0
          %279 = vst [vmem:[#allocation2 + $0x60] sm:$0xff] 0.0
          %280 = vst [vmem:[#allocation2 + $0x68] sm:$0xff] 0.0
          %281 = vst [vmem:[#allocation2 + $0x70] sm:$0xff] 0.0
          %282 = vst [vmem:[#allocation2 + $0x78] sm:$0xff] 0.0
        $region44: #{tpu_custom_call.1} parent=31 // pred_fallthru
          _
        %v283 = vld [vmem:[#allocation2] sm:$0xff]
        %v284 = vld [vmem:[#allocation2 + $0x8] sm:$0xff]
        %v285 = vld [vmem:[#allocation2 + $0x10] sm:$0xff]
        %v286 = vld [vmem:[#allocation2 + $0x18] sm:$0xff]
        %v287 = vld [vmem:[#allocation2 + $0x20] sm:$0xff]
        %v288 = vld [vmem:[#allocation2 + $0x28] sm:$0xff]
        %v289 = vld [vmem:[#allocation2 + $0x30] sm:$0xff]
        %v290 = vld [vmem:[#allocation2 + $0x38] sm:$0xff]
        %v291 = vld [vmem:[#allocation2 + $0x40] sm:$0xff]
        %v292 = vld [vmem:[#allocation2 + $0x48] sm:$0xff]
        %v293 = vld [vmem:[#allocation2 + $0x50] sm:$0xff]
        %v294 = vld [vmem:[#allocation2 + $0x58] sm:$0xff]
        %v295 = vld [vmem:[#allocation2 + $0x60] sm:$0xff]
        %v296 = vld [vmem:[#allocation2 + $0x68] sm:$0xff]
        %v297 = vld [vmem:[#allocation2 + $0x70] sm:$0xff]
        %v298 = vld [vmem:[#allocation2 + $0x78] sm:$0xff]
        %v299 = vld [vmem:[%s224] sm:$0xff]
        %v300 = vld [vmem:[%s224 + $0x8] sm:$0xff]
        %v301 = vld [vmem:[%s224 + $0x10] sm:$0xff]
        %v302 = vld [vmem:[%s224 + $0x18] sm:$0xff]
        %v303 = vld [vmem:[%s224 + $0x20] sm:$0xff]
        %v304 = vld [vmem:[%s224 + $0x28] sm:$0xff]
        %v305 = vld [vmem:[%s224 + $0x30] sm:$0xff]
        %v306 = vld [vmem:[%s224 + $0x38] sm:$0xff]
        %v307 = vld [vmem:[%s224 + $0x40] sm:$0xff]
        %v308 = vld [vmem:[%s224 + $0x48] sm:$0xff]
        %v309 = vld [vmem:[%s224 + $0x50] sm:$0xff]
        %v310 = vld [vmem:[%s224 + $0x58] sm:$0xff]
        %v311 = vld [vmem:[%s224 + $0x60] sm:$0xff]
        %v312 = vld [vmem:[%s224 + $0x68] sm:$0xff]
        %v313 = vld [vmem:[%s224 + $0x70] sm:$0xff]
        %v314 = vld [vmem:[%s224 + $0x78] sm:$0xff]
        %v315 = vld [vmem:[#allocation6] sm:$0xf]
        %v316 = vld [vmem:[#allocation6 + $0x4] sm:$0xf]
        %v317 = vld [vmem:[#allocation6 + $0x8] sm:$0xf]
        %v318 = vld [vmem:[#allocation6 + $0xc] sm:$0xf]
        %v319 = vld [vmem:[#allocation6 + $0x10] sm:$0xf]
        %v320 = vld [vmem:[#allocation6 + $0x14] sm:$0xf]
        %v321 = vld [vmem:[#allocation6 + $0x18] sm:$0xf]
        %v322 = vld [vmem:[#allocation6 + $0x1c] sm:$0xf]
        %v323 = vld [vmem:[#allocation6 + $0x20] sm:$0xf]
        %v324 = vld [vmem:[#allocation6 + $0x24] sm:$0xf]
        %v325 = vld [vmem:[#allocation6 + $0x28] sm:$0xf]
        %v326 = vld [vmem:[#allocation6 + $0x2c] sm:$0xf]
        %v327 = vld [vmem:[#allocation6 + $0x30] sm:$0xf]
        %v328 = vld [vmem:[#allocation6 + $0x34] sm:$0xf]
        %v329 = vld [vmem:[#allocation6 + $0x38] sm:$0xf]
        %v330 = vld [vmem:[#allocation6 + $0x3c] sm:$0xf]
        %v331 = vld [vmem:[#allocation6 + $0x40] sm:$0xf]
        %v332 = vld [vmem:[#allocation6 + $0x44] sm:$0xf]
        %v333 = vld [vmem:[#allocation6 + $0x48] sm:$0xf]
        %v334 = vld [vmem:[#allocation6 + $0x4c] sm:$0xf]
        %v335 = vld [vmem:[#allocation6 + $0x50] sm:$0xf]
        %v336 = vld [vmem:[#allocation6 + $0x54] sm:$0xf]
        %v337 = vld [vmem:[#allocation6 + $0x58] sm:$0xf]
        %v338 = vld [vmem:[#allocation6 + $0x5c] sm:$0xf]
        %v339 = vld [vmem:[#allocation6 + $0x60] sm:$0xf]
        %v340 = vld [vmem:[#allocation6 + $0x64] sm:$0xf]
        %v341 = vld [vmem:[#allocation6 + $0x68] sm:$0xf]
        %v342 = vld [vmem:[#allocation6 + $0x6c] sm:$0xf]
        %v343 = vld [vmem:[#allocation6 + $0x70] sm:$0xf]
        %v344 = vld [vmem:[#allocation6 + $0x74] sm:$0xf]
        %v345 = vld [vmem:[#allocation6 + $0x78] sm:$0xf]
        %v346 = vld [vmem:[#allocation6 + $0x7c] sm:$0xf]
        %v363 = vunpack.c.l.b16 %v299
        %v364 = vunpack.c.h.b16 %v299
        %v365 = vunpack.c.l.b16 %v300
        %v366 = vunpack.c.h.b16 %v300
        %v367 = vunpack.c.l.b16 %v301
        %v368 = vunpack.c.h.b16 %v301
        %v369 = vunpack.c.l.b16 %v302
        %v370 = vunpack.c.h.b16 %v302
        %v371 = vunpack.c.l.b16 %v303
        %v372 = vunpack.c.h.b16 %v303
        %v373 = vunpack.c.l.b16 %v304
        %v374 = vunpack.c.h.b16 %v304
        %v375 = vunpack.c.l.b16 %v305
        %v376 = vunpack.c.h.b16 %v305
        %v377 = vunpack.c.l.b16 %v306
        %v378 = vunpack.c.h.b16 %v306
        %v379 = vunpack.c.l.b16 %v307
        %v380 = vunpack.c.h.b16 %v307
        %v381 = vunpack.c.l.b16 %v308
        %v382 = vunpack.c.h.b16 %v308
        %v383 = vunpack.c.l.b16 %v309
        %v384 = vunpack.c.h.b16 %v309
        %v385 = vunpack.c.l.b16 %v310
        %v386 = vunpack.c.h.b16 %v310
        %v387 = vunpack.c.l.b16 %v311
        %v388 = vunpack.c.h.b16 %v311
        %v389 = vunpack.c.l.b16 %v312
        %v390 = vunpack.c.h.b16 %v312
        %v391 = vunpack.c.l.b16 %v313
        %v392 = vunpack.c.h.b16 %v313
        %v393 = vunpack.c.l.b16 %v314
        %v394 = vunpack.c.h.b16 %v314
        %v395 = vpack.c.b16 %v365, %v363
        %v396 = vpack.c.b16 %v366, %v364
        %v397 = vpack.c.b16 %v369, %v367
        %v398 = vpack.c.b16 %v370, %v368
        %v399 = vpack.c.b16 %v373, %v371
        %v400 = vpack.c.b16 %v374, %v372
        %v401 = vpack.c.b16 %v377, %v375
        %v402 = vpack.c.b16 %v378, %v376
        %v403 = vpack.c.b16 %v381, %v379
        %v404 = vpack.c.b16 %v382, %v380
        %v405 = vpack.c.b16 %v385, %v383
        %v406 = vpack.c.b16 %v386, %v384
        %v407 = vpack.c.b16 %v389, %v387
        %v408 = vpack.c.b16 %v390, %v388
        %v409 = vpack.c.b16 %v393, %v391
        %v410 = vpack.c.b16 %v394, %v392
        %v459 = vunpack.c.l.b16 %v315
        %v460 = vunpack.c.l.b16 %v316
        %v461 = vunpack.c.l.b16 %v317
        %v462 = vunpack.c.l.b16 %v318
        %v463 = vunpack.c.l.b16 %v319
        %v464 = vunpack.c.l.b16 %v320
        %v465 = vunpack.c.l.b16 %v321
        %v466 = vunpack.c.l.b16 %v322
        %v467 = vunpack.c.l.b16 %v323
        %v468 = vunpack.c.l.b16 %v324
        %v469 = vunpack.c.l.b16 %v325
        %v470 = vunpack.c.l.b16 %v326
        %v471 = vunpack.c.l.b16 %v327
        %v472 = vunpack.c.l.b16 %v328
        %v473 = vunpack.c.l.b16 %v329
        %v474 = vunpack.c.l.b16 %v330
        %v475 = vunpack.c.l.b16 %v331
        %v476 = vunpack.c.l.b16 %v332
        %v477 = vunpack.c.l.b16 %v333
        %v478 = vunpack.c.l.b16 %v334
        %v479 = vunpack.c.l.b16 %v335
        %v480 = vunpack.c.l.b16 %v336
        %v481 = vunpack.c.l.b16 %v337
        %v482 = vunpack.c.l.b16 %v338
        %v483 = vunpack.c.l.b16 %v339
        %v484 = vunpack.c.l.b16 %v340
        %v485 = vunpack.c.l.b16 %v341
        %v486 = vunpack.c.l.b16 %v342
        %v487 = vunpack.c.l.b16 %v343
        %v488 = vunpack.c.l.b16 %v344
        %v489 = vunpack.c.l.b16 %v345
        %v490 = vunpack.c.l.b16 %v346
        %v491 = vpack.c.b16 %v460, %v459
        %v492 = vpack.c.b16 %v462, %v461
        %v493 = vpack.c.b16 %v464, %v463
        %v494 = vpack.c.b16 %v466, %v465
        %v495 = vpack.c.b16 %v468, %v467
        %v496 = vpack.c.b16 %v470, %v469
        %v497 = vpack.c.b16 %v472, %v471
        %v498 = vpack.c.b16 %v474, %v473
        %v499 = vpack.c.b16 %v476, %v475
        %v500 = vpack.c.b16 %v478, %v477
        %v501 = vpack.c.b16 %v480, %v479
        %v502 = vpack.c.b16 %v482, %v481
        %v503 = vpack.c.b16 %v484, %v483
        %v504 = vpack.c.b16 %v486, %v485
        %v505 = vpack.c.b16 %v488, %v487
        %v506 = vpack.c.b16 %v490, %v489
        %523 = vmatpush.bf16.msra.mxu0 %v498
        %524 = vmatpush.bf16.msra.mxu0 %v497
        %525 = vmatpush.bf16.msra.mxu0 %v496
        %526 = vmatpush.bf16.msra.mxu0 %v495
        %527 = vmatpush.bf16.msra.mxu0 %v494
        %528 = vmatpush.bf16.msra.mxu0 %v493
        %529 = vmatpush.bf16.msra.mxu0 %v492
        %530 = vmatpush.bf16.msra.mxu0 %v491
        %531 = vmatmul.bf16.gmra.mxu0 %v395
        %v532 = vpop.f32.mrf.mxu0
        %v533 = vadd.f32 0.0, %v532
        %v534 = vpop.f32.mrf.mxu0
        %v535 = vadd.f32 0.0, %v534
        %536 = vmatmul.bf16.gmra.mxu0 %v397
        %v537 = vpop.f32.mrf.mxu0
        %v538 = vadd.f32 0.0, %v537
        %v539 = vpop.f32.mrf.mxu0
        %v540 = vadd.f32 0.0, %v539
        %541 = vmatmul.bf16.gmra.mxu0 %v399
        %v542 = vpop.f32.mrf.mxu0
        %v543 = vadd.f32 0.0, %v542
        %v544 = vpop.f32.mrf.mxu0
        %v545 = vadd.f32 0.0, %v544
        %546 = vmatmul.bf16.gmra.mxu0 %v401
        %v547 = vpop.f32.mrf.mxu0
        %v548 = vadd.f32 0.0, %v547
        %v549 = vpop.f32.mrf.mxu0
        %v550 = vadd.f32 0.0, %v549
        %551 = vmatmul.bf16.gmra.mxu0 %v403
        %v552 = vpop.f32.mrf.mxu0
        %v553 = vadd.f32 0.0, %v552
        %v554 = vpop.f32.mrf.mxu0
        %v555 = vadd.f32 0.0, %v554
        %556 = vmatmul.bf16.gmra.mxu0 %v405
        %v557 = vpop.f32.mrf.mxu0
        %v558 = vadd.f32 0.0, %v557
        %v559 = vpop.f32.mrf.mxu0
        %v560 = vadd.f32 0.0, %v559
        %561 = vmatmul.bf16.gmra.mxu0 %v407
        %v562 = vpop.f32.mrf.mxu0
        %v563 = vadd.f32 0.0, %v562
        %v564 = vpop.f32.mrf.mxu0
        %v565 = vadd.f32 0.0, %v564
        %566 = vmatmul.bf16.gmra.mxu0 %v409
        %v567 = vpop.f32.mrf.mxu0
        %v568 = vadd.f32 0.0, %v567
        %v569 = vpop.f32.mrf.mxu0
        %v570 = vadd.f32 0.0, %v569
        %571 = vdwg.mxu0
        %572 = vmatpush.bf16.msra.mxu0 %v506
        %573 = vmatpush.bf16.msra.mxu0 %v505
        %574 = vmatpush.bf16.msra.mxu0 %v504
        %575 = vmatpush.bf16.msra.mxu0 %v503
        %576 = vmatpush.bf16.msra.mxu0 %v502
        %577 = vmatpush.bf16.msra.mxu0 %v501
        %578 = vmatpush.bf16.msra.mxu0 %v500
        %579 = vmatpush.bf16.msra.mxu0 %v499
        %580 = vmatmul.bf16.gmra.mxu0 %v396
        %v581 = vpop.f32.mrf.mxu0
        %v582 = vadd.f32 %v533, %v581
        %v583 = vpop.f32.mrf.mxu0
        %v584 = vadd.f32 %v535, %v583
        %585 = vmatmul.bf16.gmra.mxu0 %v398
        %v586 = vpop.f32.mrf.mxu0
        %v587 = vadd.f32 %v538, %v586
        %v588 = vpop.f32.mrf.mxu0
        %v589 = vadd.f32 %v540, %v588
        %590 = vmatmul.bf16.gmra.mxu0 %v400
        %v591 = vpop.f32.mrf.mxu0
        %v592 = vadd.f32 %v543, %v591
        %v593 = vpop.f32.mrf.mxu0
        %v594 = vadd.f32 %v545, %v593
        %595 = vmatmul.bf16.gmra.mxu0 %v402
        %v596 = vpop.f32.mrf.mxu0
        %v597 = vadd.f32 %v548, %v596
        %v598 = vpop.f32.mrf.mxu0
        %v599 = vadd.f32 %v550, %v598
        %600 = vmatmul.bf16.gmra.mxu0 %v404
        %v601 = vpop.f32.mrf.mxu0
        %v602 = vadd.f32 %v553, %v601
        %v603 = vpop.f32.mrf.mxu0
        %v604 = vadd.f32 %v555, %v603
        %605 = vmatmul.bf16.gmra.mxu0 %v406
        %v606 = vpop.f32.mrf.mxu0
        %v607 = vadd.f32 %v558, %v606
        %v608 = vpop.f32.mrf.mxu0
        %v609 = vadd.f32 %v560, %v608
        %610 = vmatmul.bf16.gmra.mxu0 %v408
        %v611 = vpop.f32.mrf.mxu0
        %v612 = vadd.f32 %v563, %v611
        %v613 = vpop.f32.mrf.mxu0
        %v614 = vadd.f32 %v565, %v613
        %615 = vmatmul.bf16.gmra.mxu0 %v410
        %v616 = vpop.f32.mrf.mxu0
        %v617 = vadd.f32 %v568, %v616
        %v618 = vpop.f32.mrf.mxu0
        %v619 = vadd.f32 %v570, %v618
        %620 = vdwg.mxu0
        %v621 = vadd.f32 %v283, %v582
        %v622 = vadd.f32 %v284, %v584
        %v623 = vadd.f32 %v285, %v587
        %v624 = vadd.f32 %v286, %v589
        %v625 = vadd.f32 %v287, %v592
        %v626 = vadd.f32 %v288, %v594
        %v627 = vadd.f32 %v289, %v597
        %v628 = vadd.f32 %v290, %v599
        %v629 = vadd.f32 %v291, %v602
        %v630 = vadd.f32 %v292, %v604
        %v631 = vadd.f32 %v293, %v607
        %v632 = vadd.f32 %v294, %v609
        %v633 = vadd.f32 %v295, %v612
        %v634 = vadd.f32 %v296, %v614
        %v635 = vadd.f32 %v297, %v617
        %v636 = vadd.f32 %v298, %v619
        %637 = vst [vmem:[#allocation2] sm:$0xff] %v621
        %638 = vst [vmem:[#allocation2 + $0x8] sm:$0xff] %v622
        %639 = vst [vmem:[#allocation2 + $0x10] sm:$0xff] %v623
        %640 = vst [vmem:[#allocation2 + $0x18] sm:$0xff] %v624
        %641 = vst [vmem:[#allocation2 + $0x20] sm:$0xff] %v625
        %642 = vst [vmem:[#allocation2 + $0x28] sm:$0xff] %v626
        %643 = vst [vmem:[#allocation2 + $0x30] sm:$0xff] %v627
        %644 = vst [vmem:[#allocation2 + $0x38] sm:$0xff] %v628
        %645 = vst [vmem:[#allocation2 + $0x40] sm:$0xff] %v629
        %646 = vst [vmem:[#allocation2 + $0x48] sm:$0xff] %v630
        %647 = vst [vmem:[#allocation2 + $0x50] sm:$0xff] %v631
        %648 = vst [vmem:[#allocation2 + $0x58] sm:$0xff] %v632
        %649 = vst [vmem:[#allocation2 + $0x60] sm:$0xff] %v633
        %650 = vst [vmem:[#allocation2 + $0x68] sm:$0xff] %v634
        %651 = vst [vmem:[#allocation2 + $0x70] sm:$0xff] %v635
        %652 = vst [vmem:[#allocation2 + $0x78] sm:$0xff] %v636
        // Predicated region
        $region45: #{tpu_custom_call.1} parent=31 // pred_check
          %p653 = pneg %p263
        $region46: #{tpu_custom_call.1} parent=31 // pred_check_branch
          %655 = sbr.rel (%p653) target = $region48
        $region47: #{tpu_custom_call.1} parent=31 // pred_region
          %v656 = vld [vmem:[#allocation2] sm:$0xff]
          %v657 = vld [vmem:[#allocation2 + $0x8] sm:$0xff]
          %v658 = vld [vmem:[#allocation2 + $0x10] sm:$0xff]
          %v659 = vld [vmem:[#allocation2 + $0x18] sm:$0xff]
          %v660 = vld [vmem:[#allocation2 + $0x20] sm:$0xff]
          %v661 = vld [vmem:[#allocation2 + $0x28] sm:$0xff]
          %v662 = vld [vmem:[#allocation2 + $0x30] sm:$0xff]
          %v663 = vld [vmem:[#allocation2 + $0x38] sm:$0xff]
          %v664 = vld [vmem:[#allocation2 + $0x40] sm:$0xff]
          %v665 = vld [vmem:[#allocation2 + $0x48] sm:$0xff]
          %v666 = vld [vmem:[#allocation2 + $0x50] sm:$0xff]
          %v667 = vld [vmem:[#allocation2 + $0x58] sm:$0xff]
          %v668 = vld [vmem:[#allocation2 + $0x60] sm:$0xff]
          %v669 = vld [vmem:[#allocation2 + $0x68] sm:$0xff]
          %v670 = vld [vmem:[#allocation2 + $0x70] sm:$0xff]
          %v671 = vld [vmem:[#allocation2 + $0x78] sm:$0xff]
          %v672 = vld [vmem:[%s261] sm:$0x1]
          %v674 = vperm.slane %v672, 0
          %v676 = vadd.f32 %v656, %v674
          %v677 = vadd.f32 %v657, %v674
          %v678 = vadd.f32 %v658, %v674
          %v679 = vadd.f32 %v659, %v674
          %v680 = vadd.f32 %v660, %v674
          %v681 = vadd.f32 %v661, %v674
          %v682 = vadd.f32 %v662, %v674
          %v683 = vadd.f32 %v663, %v674
          %v684 = vadd.f32 %v664, %v674
          %v685 = vadd.f32 %v665, %v674
          %v686 = vadd.f32 %v666, %v674
          %v687 = vadd.f32 %v667, %v674
          %v688 = vadd.f32 %v668, %v674
          %v689 = vadd.f32 %v669, %v674
          %v690 = vadd.f32 %v670, %v674
          %v691 = vadd.f32 %v671, %v674
          %v692 = vmax.f32 %v676, 0.0
          %v693 = vmax.f32 %v677, 0.0
          %v694 = vmax.f32 %v678, 0.0
          %v695 = vmax.f32 %v679, 0.0
          %v696 = vmax.f32 %v680, 0.0
          %v697 = vmax.f32 %v681, 0.0
          %v698 = vmax.f32 %v682, 0.0
          %v699 = vmax.f32 %v683, 0.0
          %v700 = vmax.f32 %v684, 0.0
          %v701 = vmax.f32 %v685, 0.0
          %v702 = vmax.f32 %v686, 0.0
          %v703 = vmax.f32 %v687, 0.0
          %v704 = vmax.f32 %v688, 0.0
          %v705 = vmax.f32 %v689, 0.0
          %v706 = vmax.f32 %v690, 0.0
          %v707 = vmax.f32 %v691, 0.0
          %v708 = vpack.c.bf16 %v692, %v692
          %v709 = vpack.c.bf16 %v693, %v693
          %v710 = vpack.c.bf16 %v694, %v694
          %v711 = vpack.c.bf16 %v695, %v695
          %v712 = vpack.c.bf16 %v696, %v696
          %v713 = vpack.c.bf16 %v697, %v697
          %v714 = vpack.c.bf16 %v698, %v698
          %v715 = vpack.c.bf16 %v699, %v699
          %v716 = vpack.c.bf16 %v700, %v700
          %v717 = vpack.c.bf16 %v701, %v701
          %v718 = vpack.c.bf16 %v702, %v702
          %v719 = vpack.c.bf16 %v703, %v703
          %v720 = vpack.c.bf16 %v704, %v704
          %v721 = vpack.c.bf16 %v705, %v705
          %v722 = vpack.c.bf16 %v706, %v706
          %v723 = vpack.c.bf16 %v707, %v707
          %724 = vst [vmem:[%s255] sm:$0xf] %v708
          %725 = vst [vmem:[%s255 + $0x4] sm:$0xf] %v709
          %726 = vst [vmem:[%s255 + $0x8] sm:$0xf] %v710
          %727 = vst [vmem:[%s255 + $0xc] sm:$0xf] %v711
          %728 = vst [vmem:[%s255 + $0x10] sm:$0xf] %v712
          %729 = vst [vmem:[%s255 + $0x14] sm:$0xf] %v713
          %730 = vst [vmem:[%s255 + $0x18] sm:$0xf] %v714
          %731 = vst [vmem:[%s255 + $0x1c] sm:$0xf] %v715
          %732 = vst [vmem:[%s255 + $0x20] sm:$0xf] %v716
          %733 = vst [vmem:[%s255 + $0x24] sm:$0xf] %v717
          %734 = vst [vmem:[%s255 + $0x28] sm:$0xf] %v718
          %735 = vst [vmem:[%s255 + $0x2c] sm:$0xf] %v719
          %736 = vst [vmem:[%s255 + $0x30] sm:$0xf] %v720
          %737 = vst [vmem:[%s255 + $0x34] sm:$0xf] %v721
          %738 = vst [vmem:[%s255 + $0x38] sm:$0xf] %v722
          %739 = vst [vmem:[%s255 + $0x3c] sm:$0xf] %v723
        $region48: #{tpu_custom_call.1} parent=31 // pred_fallthru
          _
        %s740 = sand.u32 %s132, 1
        %s741 = scalar_lea.sflag [#allocation5], %s740
        %s742 = sand.u32 %s132, 1
        %s743 = smul.addr %s742, 64
        %s744 = scalar_lea.vmem [#allocation8], %s743
        // Predicated region
        $region49: #{tpu_custom_call.1} parent=31 // pred_check
          %p745 = pneg %p142
        $region50: #{tpu_custom_call.1} parent=31 // pred_check_branch
          %747 = sbr.rel (%p745) target = $region52
        $region51: #{tpu_custom_call.1} parent=31 // pred_region
          %s748 = smul.u32 16, %s26
          %750 = vsyncadd %s741, 0
          %s751 = sadd.s32 %s27, %s748
          %s752 = smul.addr %s751, 4
          %s753 = scalar_lea.hbm %s3, %s752
          %s754 = sshll.u32 %s744, 4
          %s755 = int_to_ptr.vmem [resolvable:$true] %s754
          %s756 = sshll.u32 %s753, 4
          %s757 = int_to_ptr.hbm [resolvable:$true] %s756
          %762 = dma.vmem_to_hbm [thread:$0]  %s755, 1024, %s757, %s741, 64, 64, 4
        $region52: #{tpu_custom_call.1} parent=31 // pred_fallthru
          _
      $region32: #{tpu_custom_call.1} parent=5 // pred_fallthru
        _
      %p763 = scmp.le.s32.totalorder 2, %s16
      // Predicated region
      $region53: #{tpu_custom_call.1} parent=5 // pred_check
        %p764 = pneg %p763
      $region54: #{tpu_custom_call.1} parent=5 // pred_check_branch
        %766 = sbr.rel (%p764) target = $region56
      $region55: #{tpu_custom_call.1} parent=5 // pred_region
        %s767 = ssub.s32 %s16, 2
        // Predicated region
        $region57: #{tpu_custom_call.1} parent=55 // pred_check
          %p768 = pneg %p148
        $region58: #{tpu_custom_call.1} parent=55 // pred_check_branch
          %770 = sbr.rel (%p768) target = $region60
        $region59: #{tpu_custom_call.1} parent=55 // pred_region
          %s771 = sand.u32 %s133, 1
          %s772 = scalar_lea.sflag [#allocation5], %s771
          %s773 = sand.u32 %s133, 1
          %s774 = smul.addr %s773, 64
          %s775 = scalar_lea.vmem [#allocation8], %s774
          %777 = dma.done %s772, 1024
        $region60: #{tpu_custom_call.1} parent=55 // pred_fallthru
          _
      $region56: #{tpu_custom_call.1} parent=5 // pred_fallthru
        _
    $region6: #{tpu_custom_call.1} parent=1 // loop_footer
      %s20 = sadd.s32 1, %s16
    $region7: #{tpu_custom_call.1} parent=1 // loop_footer_branch
      %15 = sbr.rel target = $region3
    $region8: #{tpu_custom_call.1} parent=1 // loop_exit
      _
    %778 = vsyncpa [#allocation4], 1
    %s779 = scalar_lea.sflag [#allocation4], 1
    %780 = vsyncpa %s779, 1
    %781 = vsyncpa [#allocation7], 1
    %782 = vsyncpa [#allocation5], 1
    %s783 = scalar_lea.sflag [#allocation5], 1
    %784 = vsyncpa %s783, 1

</llo_original>
